<compile_context>
chip_gen: v7x
topology: tpu7x:2x2x1
jax: 0.10.0
libtpu: 0.0.40
codegen_flags: <defaults>
</compile_context>

<pallas_src>
import jax
import jax.numpy as jnp
from jax.experimental import pallas as pl
from jax.experimental.pallas import tpu as pltpu

_H1, _H2 = 64, 32
_LANES = 128


def _round_up(n, m):
    return ((n + m - 1) // m) * m


def _qnet_kernel(x_ref, w1_ref, b1_ref, w2_ref, b2_ref, w3_ref, b3_ref, o_ref):
    """One batch tile: relu(x@W1+b1) -> relu(.@W2+b2) -> .@W3+b3."""
    x = x_ref[...]                                   # (TB, K) f32
    k_dim = w1_ref.shape[0]

    if k_dim <= 8:
        # VPU path: tiny K contraction unrolled as broadcast mul-adds, keeping
        # the MXU/vex slot free for layers 2-3.
        w1 = w1_ref[...]                             # (K, 64) f32
        h1 = x[:, 0:1] * w1[0:1, :]
        for k in range(1, k_dim):
            h1 = h1 + x[:, k:k + 1] * w1[k:k + 1, :]
        h1 = h1 + b1_ref[...]
    else:
        h1 = jnp.dot(x, w1_ref[...], preferred_element_type=jnp.float32)
        h1 = h1 + b1_ref[...]
    h1 = jnp.maximum(h1, 0.0)                        # (TB, 64) f32

    # MXU layers: bf16 operands, f32 accumulation, f32 bias add.
    h2 = jnp.dot(h1.astype(jnp.bfloat16), w2_ref[...],
                 preferred_element_type=jnp.float32) + b2_ref[...]
    h2 = jnp.maximum(h2, 0.0)                        # (TB, 32) f32

    out = jnp.dot(h2.astype(jnp.bfloat16), w3_ref[...],
                  preferred_element_type=jnp.float32) + b3_ref[...]
    o_ref[...] = out.astype(o_ref.dtype)             # (TB, 128) lane-dense store


def qnetwork_forward(x, params, *, block_b=1024):
    """x: (B, input_size) float32. params: dict of w1,b1,w2,b2,w3,b3 (float32)."""
    w1, b1 = params["w1"], params["b1"]
    w2, b2 = params["w2"], params["b2"]
    w3, b3 = params["w3"], params["b3"]

    B, K = x.shape
    out_size = w3.shape[1]

    # Lane-dense output: pad fc3 to a multiple of 128 output lanes with zeros.
    n_pad = _round_up(max(out_size, _LANES), _LANES)
    w3p = jnp.zeros((w3.shape[0], n_pad), jnp.bfloat16).at[:, :out_size].set(
        w3.astype(jnp.bfloat16))
    b3p = jnp.zeros((1, n_pad), jnp.float32).at[:, :out_size].set(b3)

    # bf16 weights for the MXU layers (accumulation stays f32 in-kernel).
    w2b = w2.astype(jnp.bfloat16)

    # Batch tiling: tile must be a multiple of 8; pad B up to a tile multiple.
    tb = min(_round_up(block_b, 8), _round_up(B, 8))
    b_pad = _round_up(B, tb)
    if b_pad != B:
        x = jnp.pad(x, ((0, b_pad - B), (0, 0)))

    grid = (pl.cdiv(b_pad, tb),)

    def const(a):
        return pl.BlockSpec(a.shape, lambda i: (0, 0))   # resident across steps

    out = pl.pallas_call(
        _qnet_kernel,
        out_shape=jax.ShapeDtypeStruct((b_pad, n_pad), jnp.float32),
        grid=grid,
        in_specs=[
            pl.BlockSpec((tb, K), lambda i: (i, 0)),      # x (batch-tiled)
            const(w1), const(b1),                          # fc1 (f32, VPU path)
            const(w2b), const(b2),                         # fc2 (bf16 W)
            const(w3p), const(b3p),                        # fc3 (bf16 W, 128-lane pad)
        ],
        out_specs=pl.BlockSpec((tb, n_pad), lambda i: (i, 0)),
        compiler_params=pltpu.CompilerParams(
            dimension_semantics=("parallel",),             # megacore on v7x
            vmem_limit_bytes=32 * 1024 * 1024,
        ),
    )(x, w1, b1, w2b, b2, w3p, b3p)

    return out[:B, :out_size]


def init_qnetwork_params(key, input_size, output_size):
    """Deterministic init mimicking nn.Linear's U(-1/sqrt(fan_in), 1/sqrt(fan_in))."""
    sizes = [(input_size, _H1), (_H1, _H2), (_H2, output_size)]
    params = {}
    for i, (fan_in, fan_out) in enumerate(sizes, start=1):
        key, kw, kb = jax.random.split(key, 3)
        bound = 1.0 / jnp.sqrt(jnp.float32(fan_in))
        params[f"w{i}"] = jax.random.uniform(
            kw, (fan_in, fan_out), jnp.float32, -bound, bound)
        params[f"b{i}"] = jax.random.uniform(
            kb, (1, fan_out), jnp.float32, -bound, bound)
    return params


def _reference_forward(x, p, *, emulate_bf16=True):
    hi = jax.lax.Precision.HIGHEST
    h1 = jnp.maximum(jnp.dot(x, p["w1"], precision=hi) + p["b1"], 0.0)
    if emulate_bf16:
        h2 = jnp.dot(h1.astype(jnp.bfloat16), p["w2"].astype(jnp.bfloat16),
                     preferred_element_type=jnp.float32) + p["b2"]
        h2 = jnp.maximum(h2, 0.0)
        return jnp.dot(h2.astype(jnp.bfloat16), p["w3"].astype(jnp.bfloat16),
                       preferred_element_type=jnp.float32) + p["b3"]
    h2 = jnp.maximum(jnp.dot(h1, p["w2"], precision=hi) + p["b2"], 0.0)
    return jnp.dot(h2, p["w3"], precision=hi) + p["b3"]


if __name__ == "__main__":
    # DQL.py uses state = torch.tensor([10.0, 5.0]) -> input_size=2; pick 4 actions.
    input_size, output_size = 2, 4

    key = jax.random.PRNGKey(0)
    k_params, k_x = jax.random.split(key)
    params = init_qnetwork_params(k_params, input_size, output_size)

    # Replay-batch style call (the path this kernel is optimized for).
    # block_b=128 -> grid=(4,) so batch tiling + resident weights are exercised.
    batch = 512
    x = jax.random.uniform(k_x, (batch, input_size), jnp.float32, 0.0, 10.0)
    out = jax.block_until_ready(qnetwork_forward(x, params, block_b=128))

    assert out.shape == (batch, output_size)
    ref_bf16 = _reference_forward(x, params, emulate_bf16=True)
    ref_f32 = _reference_forward(x, params, emulate_bf16=False)
    assert jnp.allclose(out, ref_bf16, rtol=1e-2, atol=1e-2), "mismatch vs bf16 ref"
    assert jnp.allclose(out, ref_f32, rtol=1e-1, atol=2.5e-1), "mismatch vs f32 ref"

    # Single-state call matching the original script's state tensor.
    state = jnp.array([[10.0, 5.0]], jnp.float32)
    out1 = jax.block_until_ready(qnetwork_forward(state, params))
    ref1 = _reference_forward(state, params, emulate_bf16=True)
    assert out1.shape == (1, output_size)
    assert jnp.allclose(out1, ref1, rtol=1e-2, atol=1e-2), "mismatch (single state)"

    print("KERNEL_OK")
</pallas_src>

<mosaic_0001>
module attributes {stable_mosaic.version = 11 : i64} {
  func.func @_qnet_kernel(%arg0: i32, %arg1: memref<128x2xf32, #tpu.memory_space<vmem>>, %arg2: memref<2x64xf32, #tpu.memory_space<vmem>>, %arg3: memref<1x64xf32, #tpu.memory_space<vmem>>, %arg4: memref<64x32xbf16, #tpu.memory_space<vmem>>, %arg5: memref<1x32xf32, #tpu.memory_space<vmem>>, %arg6: memref<32x128xbf16, #tpu.memory_space<vmem>>, %arg7: memref<1x128xf32, #tpu.memory_space<vmem>>, %arg8: memref<128x128xf32, #tpu.memory_space<vmem>>) attributes {dimension_semantics = [#tpu.dimension_semantics<parallel>], iteration_bounds = array<i64: 4>, scalar_prefetch = 0 : i64, scratch_operands = 0 : i64, tpu.core_type = #tpu.core_type<tc>, window_params = [{transform_indices = @transform_0, window_bounds = array<i64: 128, 2>}, {pipeline_mode = #tpu.pipeline_mode<synchronous>, transform_indices = @transform_1, window_bounds = array<i64: 2, 64>}, {pipeline_mode = #tpu.pipeline_mode<synchronous>, transform_indices = @transform_2, window_bounds = array<i64: 1, 64>}, {pipeline_mode = #tpu.pipeline_mode<synchronous>, transform_indices = @transform_3, window_bounds = array<i64: 64, 32>}, {pipeline_mode = #tpu.pipeline_mode<synchronous>, transform_indices = @transform_4, window_bounds = array<i64: 1, 32>}, {pipeline_mode = #tpu.pipeline_mode<synchronous>, transform_indices = @transform_5, window_bounds = array<i64: 32, 128>}, {pipeline_mode = #tpu.pipeline_mode<synchronous>, transform_indices = @transform_6, window_bounds = array<i64: 1, 128>}, {transform_indices = @transform_7, window_bounds = array<i64: 128, 128>}]} {
    %c0 = arith.constant 0 : index
    %c0_0 = arith.constant 0 : index
    %0 = vector.load %arg1[%c0, %c0_0] : memref<128x2xf32, #tpu.memory_space<vmem>>, vector<128x2xf32>
    %c0_1 = arith.constant 0 : index
    %c0_2 = arith.constant 0 : index
    %1 = vector.load %arg2[%c0_1, %c0_2] : memref<2x64xf32, #tpu.memory_space<vmem>>, vector<2x64xf32>
    %2 = vector.extract_strided_slice %0 {offsets = [0, 0], sizes = [128, 1], strides = [1, 1]} : vector<128x2xf32> to vector<128x1xf32>
    %3 = vector.extract_strided_slice %1 {offsets = [0, 0], sizes = [1, 64], strides = [1, 1]} : vector<2x64xf32> to vector<1x64xf32>
    %4 = vector.broadcast %2 : vector<128x1xf32> to vector<128x64xf32>
    %5 = vector.broadcast %3 : vector<1x64xf32> to vector<128x64xf32>
    %6 = arith.mulf %4, %5 : vector<128x64xf32>
    %7 = vector.extract_strided_slice %0 {offsets = [0, 1], sizes = [128, 1], strides = [1, 1]} : vector<128x2xf32> to vector<128x1xf32>
    %8 = vector.extract_strided_slice %1 {offsets = [1, 0], sizes = [1, 64], strides = [1, 1]} : vector<2x64xf32> to vector<1x64xf32>
    %9 = vector.broadcast %7 : vector<128x1xf32> to vector<128x64xf32>
    %10 = vector.broadcast %8 : vector<1x64xf32> to vector<128x64xf32>
    %11 = arith.mulf %9, %10 : vector<128x64xf32>
    %12 = arith.addf %6, %11 : vector<128x64xf32>
    %c0_3 = arith.constant 0 : index
    %c0_4 = arith.constant 0 : index
    %13 = vector.load %arg3[%c0_3, %c0_4] : memref<1x64xf32, #tpu.memory_space<vmem>>, vector<1x64xf32>
    %14 = vector.broadcast %13 : vector<1x64xf32> to vector<128x64xf32>
    %15 = arith.addf %12, %14 : vector<128x64xf32>
    %cst = arith.constant 0.000000e+00 : f32
    %16 = vector.broadcast %cst : f32 to vector<128x64xf32>
    %17 = arith.maximumf %15, %16 : vector<128x64xf32>
    %18 = arith.truncf %17 : vector<128x64xf32> to vector<128x64xbf16>
    %c0_5 = arith.constant 0 : index
    %c0_6 = arith.constant 0 : index
    %19 = vector.load %arg4[%c0_5, %c0_6] : memref<64x32xbf16, #tpu.memory_space<vmem>>, vector<64x32xbf16>
    %cst_7 = arith.constant dense<0.000000e+00> : vector<128x32xf32>
    %20 = tpu.matmul %18, %19, %cst_7 {dimension_numbers = #tpu.dot_dimension_numbers<[1], [0], [0], [1], [0, 0, 1, 1], [], []>} : vector<128x64xbf16>, vector<64x32xbf16>, vector<128x32xf32> -> vector<128x32xf32>
    %c0_8 = arith.constant 0 : index
    %c0_9 = arith.constant 0 : index
    %21 = vector.load %arg5[%c0_8, %c0_9] : memref<1x32xf32, #tpu.memory_space<vmem>>, vector<1x32xf32>
    %22 = vector.broadcast %21 : vector<1x32xf32> to vector<128x32xf32>
    %23 = arith.addf %20, %22 : vector<128x32xf32>
    %cst_10 = arith.constant 0.000000e+00 : f32
    %24 = vector.broadcast %cst_10 : f32 to vector<128x32xf32>
    %25 = arith.maximumf %23, %24 : vector<128x32xf32>
    %26 = arith.truncf %25 : vector<128x32xf32> to vector<128x32xbf16>
    %c0_11 = arith.constant 0 : index
    %c0_12 = arith.constant 0 : index
    %27 = vector.load %arg6[%c0_11, %c0_12] : memref<32x128xbf16, #tpu.memory_space<vmem>>, vector<32x128xbf16>
    %cst_13 = arith.constant dense<0.000000e+00> : vector<128x128xf32>
    %28 = tpu.matmul %26, %27, %cst_13 {dimension_numbers = #tpu.dot_dimension_numbers<[1], [0], [0], [1], [0, 0, 1, 1], [], []>} : vector<128x32xbf16>, vector<32x128xbf16>, vector<128x128xf32> -> vector<128x128xf32>
    %c0_14 = arith.constant 0 : index
    %c0_15 = arith.constant 0 : index
    %29 = vector.load %arg7[%c0_14, %c0_15] : memref<1x128xf32, #tpu.memory_space<vmem>>, vector<1x128xf32>
    %30 = vector.broadcast %29 : vector<1x128xf32> to vector<128x128xf32>
    %31 = arith.addf %28, %30 : vector<128x128xf32>
    %c0_16 = arith.constant 0 : index
    %c0_17 = arith.constant 0 : index
    %32 = vector.load %arg8[%c0_16, %c0_17] : memref<128x128xf32, #tpu.memory_space<vmem>>, vector<128x128xf32>
    tpu.vector_store %arg8[%c0_16, %c0_17], %31 {strides = array<i32>} : memref<128x128xf32, #tpu.memory_space<vmem>>, vector<128x128xf32>,
    return
  }
  func.func @transform_0(%arg0: i32) -> (i32, i32) {
    %c0_i32 = arith.constant 0 : i32
    %c0_i32_0 = arith.constant 0 : i32
    return %arg0, %c0_i32 : i32, i32
  }
  func.func @transform_1(%arg0: i32) -> (i32, i32) {
    %c0_i32 = arith.constant 0 : i32
    %c0_i32_0 = arith.constant 0 : i32
    %c0_i32_1 = arith.constant 0 : i32
    return %c0_i32, %c0_i32_0 : i32, i32
  }
  func.func @transform_2(%arg0: i32) -> (i32, i32) {
    %c0_i32 = arith.constant 0 : i32
    %c0_i32_0 = arith.constant 0 : i32
    %c0_i32_1 = arith.constant 0 : i32
    return %c0_i32, %c0_i32_0 : i32, i32
  }
  func.func @transform_3(%arg0: i32) -> (i32, i32) {
    %c0_i32 = arith.constant 0 : i32
    %c0_i32_0 = arith.constant 0 : i32
    %c0_i32_1 = arith.constant 0 : i32
    return %c0_i32, %c0_i32_0 : i32, i32
  }
  func.func @transform_4(%arg0: i32) -> (i32, i32) {
    %c0_i32 = arith.constant 0 : i32
    %c0_i32_0 = arith.constant 0 : i32
    %c0_i32_1 = arith.constant 0 : i32
    return %c0_i32, %c0_i32_0 : i32, i32
  }
  func.func @transform_5(%arg0: i32) -> (i32, i32) {
    %c0_i32 = arith.constant 0 : i32
    %c0_i32_0 = arith.constant 0 : i32
    %c0_i32_1 = arith.constant 0 : i32
    return %c0_i32, %c0_i32_0 : i32, i32
  }
  func.func @transform_6(%arg0: i32) -> (i32, i32) {
    %c0_i32 = arith.constant 0 : i32
    %c0_i32_0 = arith.constant 0 : i32
    %c0_i32_1 = arith.constant 0 : i32
    return %c0_i32, %c0_i32_0 : i32, i32
  }
  func.func @transform_7(%arg0: i32) -> (i32, i32) {
    %c0_i32 = arith.constant 0 : i32
    %c0_i32_0 = arith.constant 0 : i32
    return %arg0, %c0_i32 : i32, i32
  }
}

</mosaic_0001>

<llo_original>
// kernel: tpu_custom_call.1
$region0: #{tpu_custom_call.1}
  #allocation0 [shape = 'u32[]', space=smem, size = 0x4, offset = 0x4, fixed_abs, tag = 'smem constant byte address 0x4 - core index']
  #allocation1 [shape = 'u32[144,128]{1,0:T(1,128)}', space=vmem, size = 0x12000, scoped, tag = 'internal scratch']
  %s0 = inlined_call_operand.vmem [shape: f32[512,2], index: 0, kind: input, shape index: {}]
  %s1 = inlined_call_operand.vmem [shape: f32[2,64], index: 1, kind: input, shape index: {}]
  %s2 = inlined_call_operand.vmem [shape: f32[1,64], index: 2, kind: input, shape index: {}]
  %s3 = inlined_call_operand.vmem [shape: bf16[64,32], index: 3, kind: input, shape index: {}]
  %s4 = inlined_call_operand.vmem [shape: f32[1,32], index: 4, kind: input, shape index: {}]
  %s5 = inlined_call_operand.vmem [shape: bf16[32,128], index: 5, kind: input, shape index: {}]
  %s6 = inlined_call_operand.vmem [shape: f32[1,128], index: 6, kind: input, shape index: {}]
  %s7 = inlined_call_operand.hbm [shape: f32[512,128], index: 7, kind: output, shape index: {}]
  %s8 = sld [smem:[#allocation0]]
  $region61: #{tpu_custom_call.1} parent=0
    _
  %s10 = ssub.s32 1, %s8
  %s11 = scalar_select 0, %s10, %s8
  $region1: #{tpu_custom_call.1} parent=0
    #allocation2 [shape = 'u8[131072]{0}', space=vmem, size = 0x20000, scoped, tag = 'output window, operand 0']
    #allocation3 [shape = 's32[2]{0}', space=sflag, size = 0x8, scoped, tag = 'scoped memory for tpu_custom_call.1']
    %12 = vsyncpa [#allocation3], 0
    %s13 = scalar_lea.sflag [#allocation3], 1
    %14 = vsyncpa %s13, 0
    loop: start=0, step=1, limit=6
    $region2: #{tpu_custom_call.1} parent=1 // loop_pre_header
      _
    $region3: #{tpu_custom_call.1} parent=1 // loop_header
      %s16 = sphi 0, %s20
      %p17 = scmp.ge.s32.totalorder %s16, 6
      %s26 = sphi 0, %s28
      %s29 = sphi 0, %s26
      %s30 = sphi 0, %s29
      %s46 = sphi 0, %s30
      %s50 = sphi 0, %s50
      %s52 = sphi 0, %s50
      %s53 = sphi 0, %s52
      %s67 = sphi 0, %s53
      %s71 = sphi 0, %s71
      %s73 = sphi 0, %s71
      %s74 = sphi 0, %s73
      %s88 = sphi 0, %s74
      %s92 = sphi 0, %s92
      %s94 = sphi 0, %s92
      %s95 = sphi 0, %s94
      %s109 = sphi 0, %s95
      %s113 = sphi 0, %s113
      %s115 = sphi 0, %s113
      %s116 = sphi 0, %s115
      %s130 = sphi 0, %s116
      %s134 = sphi 0, %s134
      %s136 = sphi 0, %s134
      %s137 = sphi 0, %s136
      %s151 = sphi 0, %s137
      %s155 = sphi 0, %s155
      %s157 = sphi 0, %s155
      %s158 = sphi 0, %s157
      %s172 = sphi 0, %s158
      %s178 = sphi 0, %s180
      %s181 = sphi 0, %s178
      %s182 = sphi 0, %s181
      %s198 = sphi 0, %s182
    $region4: #{tpu_custom_call.1} parent=1 // loop_header_branch
      %19 = sbr.rel (%p17) target = $region8
    $region5: #{tpu_custom_call.1} parent=1 // loop_body
      %s21 = ssub.s32 %s16, 1
      %s22 = ssub.s32 %s16, 2
      %s23 = sadd.s32 %s16, 1
      %s24 = ssub.s32 %s16, %s23
      %p25 = scmp.eq.s32.totalorder %s24, 0
      %s27 = sadd.s32 %s26, 1
      %s28 = scalar_select %p25, %s26, %s27
      %p31 = pneg %p25
      %p32 = scmp.eq.s32.totalorder %s16, 3
      %p33 = por %p31, %p32
      %p34 = scmp.ne.s32.totalorder %s26, %s29
      %p35 = scmp.eq.s32.totalorder %s16, 0
      %p36 = por %p34, %p35
      %p37 = scmp.ne.s32.totalorder %s26, %s29
      %p38 = scmp.eq.s32.totalorder %s21, 3
      %p39 = por %p37, %p38
      %p40 = scmp.ne.s32.totalorder %s29, %s30
      %p41 = scmp.eq.s32.totalorder %s21, 0
      %p42 = por %p40, %p41
      %p43 = scmp.ne.s32.totalorder %s29, %s30
      %p44 = scmp.eq.s32.totalorder %s22, 3
      %p45 = por %p43, %p44
      %p47 = scmp.ne.s32.totalorder %s30, %s46
      %p48 = scmp.eq.s32.totalorder %s22, 0
      %p49 = por %p47, %p48
      %s51 = sadd.s32 %s50, 1
      %p54 = scmp.eq.s32.totalorder %s16, 3
      %p55 = scmp.ne.s32.totalorder %s50, %s52
      %p56 = scmp.eq.s32.totalorder %s16, 0
      %p57 = por %p55, %p56
      %p58 = scmp.ne.s32.totalorder %s50, %s52
      %p59 = scmp.eq.s32.totalorder %s21, 3
      %p60 = por %p58, %p59
      %p61 = scmp.ne.s32.totalorder %s52, %s53
      %p62 = scmp.eq.s32.totalorder %s21, 0
      %p63 = por %p61, %p62
      %p64 = scmp.ne.s32.totalorder %s52, %s53
      %p65 = scmp.eq.s32.totalorder %s22, 3
      %p66 = por %p64, %p65
      %p68 = scmp.ne.s32.totalorder %s53, %s67
      %p69 = scmp.eq.s32.totalorder %s22, 0
      %p70 = por %p68, %p69
      %s72 = sadd.s32 %s71, 1
      %p75 = scmp.eq.s32.totalorder %s16, 3
      %p76 = scmp.ne.s32.totalorder %s71, %s73
      %p77 = scmp.eq.s32.totalorder %s16, 0
      %p78 = por %p76, %p77
      %p79 = scmp.ne.s32.totalorder %s71, %s73
      %p80 = scmp.eq.s32.totalorder %s21, 3
      %p81 = por %p79, %p80
      %p82 = scmp.ne.s32.totalorder %s73, %s74
      %p83 = scmp.eq.s32.totalorder %s21, 0
      %p84 = por %p82, %p83
      %p85 = scmp.ne.s32.totalorder %s73, %s74
      %p86 = scmp.eq.s32.totalorder %s22, 3
      %p87 = por %p85, %p86
      %p89 = scmp.ne.s32.totalorder %s74, %s88
      %p90 = scmp.eq.s32.totalorder %s22, 0
      %p91 = por %p89, %p90
      %s93 = sadd.s32 %s92, 1
      %p96 = scmp.eq.s32.totalorder %s16, 3
      %p97 = scmp.ne.s32.totalorder %s92, %s94
      %p98 = scmp.eq.s32.totalorder %s16, 0
      %p99 = por %p97, %p98
      %p100 = scmp.ne.s32.totalorder %s92, %s94
      %p101 = scmp.eq.s32.totalorder %s21, 3
      %p102 = por %p100, %p101
      %p103 = scmp.ne.s32.totalorder %s94, %s95
      %p104 = scmp.eq.s32.totalorder %s21, 0
      %p105 = por %p103, %p104
      %p106 = scmp.ne.s32.totalorder %s94, %s95
      %p107 = scmp.eq.s32.totalorder %s22, 3
      %p108 = por %p106, %p107
      %p110 = scmp.ne.s32.totalorder %s95, %s109
      %p111 = scmp.eq.s32.totalorder %s22, 0
      %p112 = por %p110, %p111
      %s114 = sadd.s32 %s113, 1
      %p117 = scmp.eq.s32.totalorder %s16, 3
      %p118 = scmp.ne.s32.totalorder %s113, %s115
      %p119 = scmp.eq.s32.totalorder %s16, 0
      %p120 = por %p118, %p119
      %p121 = scmp.ne.s32.totalorder %s113, %s115
      %p122 = scmp.eq.s32.totalorder %s21, 3
      %p123 = por %p121, %p122
      %p124 = scmp.ne.s32.totalorder %s115, %s116
      %p125 = scmp.eq.s32.totalorder %s21, 0
      %p126 = por %p124, %p125
      %p127 = scmp.ne.s32.totalorder %s115, %s116
      %p128 = scmp.eq.s32.totalorder %s22, 3
      %p129 = por %p127, %p128
      %p131 = scmp.ne.s32.totalorder %s116, %s130
      %p132 = scmp.eq.s32.totalorder %s22, 0
      %p133 = por %p131, %p132
      %s135 = sadd.s32 %s134, 1
      %p138 = scmp.eq.s32.totalorder %s16, 3
      %p139 = scmp.ne.s32.totalorder %s134, %s136
      %p140 = scmp.eq.s32.totalorder %s16, 0
      %p141 = por %p139, %p140
      %p142 = scmp.ne.s32.totalorder %s134, %s136
      %p143 = scmp.eq.s32.totalorder %s21, 3
      %p144 = por %p142, %p143
      %p145 = scmp.ne.s32.totalorder %s136, %s137
      %p146 = scmp.eq.s32.totalorder %s21, 0
      %p147 = por %p145, %p146
      %p148 = scmp.ne.s32.totalorder %s136, %s137
      %p149 = scmp.eq.s32.totalorder %s22, 3
      %p150 = por %p148, %p149
      %p152 = scmp.ne.s32.totalorder %s137, %s151
      %p153 = scmp.eq.s32.totalorder %s22, 0
      %p154 = por %p152, %p153
      %s156 = sadd.s32 %s155, 1
      %p159 = scmp.eq.s32.totalorder %s16, 3
      %p160 = scmp.ne.s32.totalorder %s155, %s157
      %p161 = scmp.eq.s32.totalorder %s16, 0
      %p162 = por %p160, %p161
      %p163 = scmp.ne.s32.totalorder %s155, %s157
      %p164 = scmp.eq.s32.totalorder %s21, 3
      %p165 = por %p163, %p164
      %p166 = scmp.ne.s32.totalorder %s157, %s158
      %p167 = scmp.eq.s32.totalorder %s21, 0
      %p168 = por %p166, %p167
      %p169 = scmp.ne.s32.totalorder %s157, %s158
      %p170 = scmp.eq.s32.totalorder %s22, 3
      %p171 = por %p169, %p170
      %p173 = scmp.ne.s32.totalorder %s158, %s172
      %p174 = scmp.eq.s32.totalorder %s22, 0
      %p175 = por %p173, %p174
      %s176 = ssub.s32 %s16, %s23
      %p177 = scmp.eq.s32.totalorder %s176, 0
      %s179 = sadd.s32 %s178, 1
      %s180 = scalar_select %p177, %s178, %s179
      %p183 = pneg %p177
      %p184 = scmp.eq.s32.totalorder %s16, 3
      %p185 = por %p183, %p184
      %p186 = scmp.ne.s32.totalorder %s178, %s181
      %p187 = scmp.eq.s32.totalorder %s16, 0
      %p188 = por %p186, %p187
      %p189 = scmp.ne.s32.totalorder %s178, %s181
      %p190 = scmp.eq.s32.totalorder %s21, 3
      %p191 = por %p189, %p190
      %p192 = scmp.ne.s32.totalorder %s181, %s182
      %p193 = scmp.eq.s32.totalorder %s21, 0
      %p194 = por %p192, %p193
      %p195 = scmp.ne.s32.totalorder %s181, %s182
      %p196 = scmp.eq.s32.totalorder %s22, 3
      %p197 = por %p195, %p196
      %p199 = scmp.ne.s32.totalorder %s182, %s198
      %p200 = scmp.eq.s32.totalorder %s22, 0
      %p201 = por %p199, %p200
      %p202 = scmp.le.s32.totalorder 1, %s16
      %p203 = scmp.lt.s32.totalorder %s16, 5
      %p204 = pnand %p202, %p203
      %p205 = pneg %p204
      // Predicated region
      $region9: #{tpu_custom_call.1} parent=5 // pred_check
        _
      $region10: #{tpu_custom_call.1} parent=5 // pred_check_branch
        %207 = sbr.rel (%p204) target = $region12
      $region11: #{tpu_custom_call.1} parent=5 // pred_region
        %s208 = ssub.s32 %s16, 1
        // Predicated region
        $region13: #{tpu_custom_call.1} parent=11 // pred_check
          %p209 = pneg %p63
        $region14: #{tpu_custom_call.1} parent=11 // pred_check_branch
          %211 = sbr.rel (%p209) target = $region16
        $region15: #{tpu_custom_call.1} parent=11 // pred_region
          _
        $region16: #{tpu_custom_call.1} parent=11 // pred_fallthru
          _
        // Predicated region
        $region17: #{tpu_custom_call.1} parent=11 // pred_check
          %p212 = pneg %p84
        $region18: #{tpu_custom_call.1} parent=11 // pred_check_branch
          %214 = sbr.rel (%p212) target = $region20
        $region19: #{tpu_custom_call.1} parent=11 // pred_region
          _
        $region20: #{tpu_custom_call.1} parent=11 // pred_fallthru
          _
        // Predicated region
        $region21: #{tpu_custom_call.1} parent=11 // pred_check
          %p215 = pneg %p105
        $region22: #{tpu_custom_call.1} parent=11 // pred_check_branch
          %217 = sbr.rel (%p215) target = $region24
        $region23: #{tpu_custom_call.1} parent=11 // pred_region
          _
        $region24: #{tpu_custom_call.1} parent=11 // pred_fallthru
          _
        // Predicated region
        $region25: #{tpu_custom_call.1} parent=11 // pred_check
          %p218 = pneg %p126
        $region26: #{tpu_custom_call.1} parent=11 // pred_check_branch
          %220 = sbr.rel (%p218) target = $region28
        $region27: #{tpu_custom_call.1} parent=11 // pred_region
          _
        $region28: #{tpu_custom_call.1} parent=11 // pred_fallthru
          _
        // Predicated region
        $region29: #{tpu_custom_call.1} parent=11 // pred_check
          %p221 = pneg %p147
        $region30: #{tpu_custom_call.1} parent=11 // pred_check_branch
          %223 = sbr.rel (%p221) target = $region32
        $region31: #{tpu_custom_call.1} parent=11 // pred_region
          _
        $region32: #{tpu_custom_call.1} parent=11 // pred_fallthru
          _
        // Predicated region
        $region33: #{tpu_custom_call.1} parent=11 // pred_check
          %p224 = pneg %p168
        $region34: #{tpu_custom_call.1} parent=11 // pred_check_branch
          %226 = sbr.rel (%p224) target = $region36
        $region35: #{tpu_custom_call.1} parent=11 // pred_region
          _
        $region36: #{tpu_custom_call.1} parent=11 // pred_fallthru
          _
      $region12: #{tpu_custom_call.1} parent=5 // pred_fallthru
        _
      %p227 = scmp.lt.s32.totalorder %s16, 4
      // Predicated region
      $region37: #{tpu_custom_call.1} parent=5 // pred_check
        %p228 = pneg %p227
      $region38: #{tpu_custom_call.1} parent=5 // pred_check_branch
        %230 = sbr.rel (%p228) target = $region40
      $region39: #{tpu_custom_call.1} parent=5 // pred_region
        // Predicated region
        $region41: #{tpu_custom_call.1} parent=39 // pred_check
          %p231 = pneg %p36
        $region42: #{tpu_custom_call.1} parent=39 // pred_check_branch
          %233 = sbr.rel (%p231) target = $region44
        $region43: #{tpu_custom_call.1} parent=39 // pred_region
          %s234 = smul.u32 16, %s16
          %p235 = scmp.lt.s32.totalorder %s234, 63
          %s236 = scalar_select %p235, %s234, 63
          %s237 = smul.addr %s236, 8
          %s238 = scalar_lea.vmem %s0, %s237
          %s239 = smul.u32 16, %s16
        $region44: #{tpu_custom_call.1} parent=39 // pred_fallthru
          _
      $region40: #{tpu_custom_call.1} parent=5 // pred_fallthru
        _
      %p240 = scmp.le.s32.totalorder 1, %s16
      %p241 = scmp.lt.s32.totalorder %s16, 5
      %p242 = pnand %p240, %p241
      %p243 = pneg %p242
      // Predicated region
      $region45: #{tpu_custom_call.1} parent=5 // pred_check
        _
      $region46: #{tpu_custom_call.1} parent=5 // pred_check_branch
        %245 = sbr.rel (%p242) target = $region48
      $region47: #{tpu_custom_call.1} parent=5 // pred_region
        %s246 = ssub.s32 %s16, 1
        %s247 = smul.u32 16, %s21
        %p248 = scmp.lt.s32.totalorder %s247, 63
        %s249 = scalar_select %p248, %s247, 63
        %s250 = smul.addr %s249, 8
        %s251 = scalar_lea.vmem %s0, %s250
        %p252 = pneg %p42
        %p253 = pneg %p39
        %p254 = pneg %p63
        %p255 = pneg %p60
        %p256 = pneg %p84
        %p257 = pneg %p81
        %p258 = pneg %p105
        %p259 = pneg %p102
        %p260 = pneg %p126
        %p261 = pneg %p123
        %p262 = pneg %p147
        %p263 = pneg %p144
        %p264 = pneg %p168
        %p265 = pneg %p165
        %p266 = pneg %p194
        %p267 = pneg %p191
        %s268 = sand.u32 %s181, 1
        %s269 = scalar_lea.sflag [#allocation3], %s268
        %s270 = sand.u32 %s181, 1
        %s271 = smul.addr %s270, 128
        %s272 = scalar_lea.vmem [#allocation2], %s271
        %s273 = smul.u32 16, %s21
        %p274 = scmp.lt.s32.totalorder %s273, 63
        %s275 = scalar_select %p274, %s273, 63
        %s276 = smul.addr %s275, 8
        %s277 = scalar_lea.vmem %s0, %s276
        %s278 = smul.u32 16, %s21
        %s279 = smul.u32 16, %s21
        %v281 = vld [vmem:[%s277] sm:$0xff]
        %v282 = vld [vmem:[%s277 + $0x8] sm:$0xff]
        %v283 = vld [vmem:[%s277 + $0x10] sm:$0xff]
        %v284 = vld [vmem:[%s277 + $0x18] sm:$0xff]
        %v285 = vld [vmem:[%s277 + $0x20] sm:$0xff]
        %v286 = vld [vmem:[%s277 + $0x28] sm:$0xff]
        %v287 = vld [vmem:[%s277 + $0x30] sm:$0xff]
        %v288 = vld [vmem:[%s277 + $0x38] sm:$0xff]
        %v289 = vld [vmem:[%s277 + $0x40] sm:$0xff]
        %v290 = vld [vmem:[%s277 + $0x48] sm:$0xff]
        %v291 = vld [vmem:[%s277 + $0x50] sm:$0xff]
        %v292 = vld [vmem:[%s277 + $0x58] sm:$0xff]
        %v293 = vld [vmem:[%s277 + $0x60] sm:$0xff]
        %v294 = vld [vmem:[%s277 + $0x68] sm:$0xff]
        %v295 = vld [vmem:[%s277 + $0x70] sm:$0xff]
        %v296 = vld [vmem:[%s277 + $0x78] sm:$0xff]
        %v297 = vld [vmem:[%s1] sm:$0x3]
        %299 = vset.pattern.permute.xlu0 0
        %300 = vperm.xlu0 %299, %v281
        %v301 = vpop.permute.xlu0 %300
        %304 = vset.pattern.permute.xlu0 0
        %305 = vperm.xlu0 %304, %v282
        %v306 = vpop.permute.xlu0 %305
        %309 = vset.pattern.permute.xlu0 0
        %310 = vperm.xlu0 %309, %v283
        %v311 = vpop.permute.xlu0 %310
        %314 = vset.pattern.permute.xlu0 0
        %315 = vperm.xlu0 %314, %v284
        %v316 = vpop.permute.xlu0 %315
        %319 = vset.pattern.permute.xlu0 0
        %320 = vperm.xlu0 %319, %v285
        %v321 = vpop.permute.xlu0 %320
        %324 = vset.pattern.permute.xlu0 0
        %325 = vperm.xlu0 %324, %v286
        %v326 = vpop.permute.xlu0 %325
        %329 = vset.pattern.permute.xlu0 0
        %330 = vperm.xlu0 %329, %v287
        %v331 = vpop.permute.xlu0 %330
        %334 = vset.pattern.permute.xlu0 0
        %335 = vperm.xlu0 %334, %v288
        %v336 = vpop.permute.xlu0 %335
        %339 = vset.pattern.permute.xlu0 0
        %340 = vperm.xlu0 %339, %v289
        %v341 = vpop.permute.xlu0 %340
        %344 = vset.pattern.permute.xlu0 0
        %345 = vperm.xlu0 %344, %v290
        %v346 = vpop.permute.xlu0 %345
        %349 = vset.pattern.permute.xlu0 0
        %350 = vperm.xlu0 %349, %v291
        %v351 = vpop.permute.xlu0 %350
        %354 = vset.pattern.permute.xlu0 0
        %355 = vperm.xlu0 %354, %v292
        %v356 = vpop.permute.xlu0 %355
        %359 = vset.pattern.permute.xlu0 0
        %360 = vperm.xlu0 %359, %v293
        %v361 = vpop.permute.xlu0 %360
        %364 = vset.pattern.permute.xlu0 0
        %365 = vperm.xlu0 %364, %v294
        %v366 = vpop.permute.xlu0 %365
        %369 = vset.pattern.permute.xlu0 0
        %370 = vperm.xlu0 %369, %v295
        %v371 = vpop.permute.xlu0 %370
        %374 = vset.pattern.permute.xlu0 0
        %375 = vperm.xlu0 %374, %v296
        %v376 = vpop.permute.xlu0 %375
        %v378 = vlaneseq
        %v379 = vshrl.u32 %v378, 7
        %v380 = vsub.s32 0, %v379
        %v381 = vrot.slane %v297, %v380
        %v382 = vmul.f32 %v301, %v381
        %v383 = vmul.f32 %v306, %v381
        %v384 = vmul.f32 %v311, %v381
        %v385 = vmul.f32 %v316, %v381
        %v386 = vmul.f32 %v321, %v381
        %v387 = vmul.f32 %v326, %v381
        %v388 = vmul.f32 %v331, %v381
        %v389 = vmul.f32 %v336, %v381
        %v390 = vmul.f32 %v341, %v381
        %v391 = vmul.f32 %v346, %v381
        %v392 = vmul.f32 %v351, %v381
        %v393 = vmul.f32 %v356, %v381
        %v394 = vmul.f32 %v361, %v381
        %v395 = vmul.f32 %v366, %v381
        %v396 = vmul.f32 %v371, %v381
        %v397 = vmul.f32 %v376, %v381
        %398 = vset.pattern.permute.xlu0 1
        %399 = vperm.xlu0 %398, %v281
        %v400 = vpop.permute.xlu0 %399
        %402 = vset.pattern.permute.xlu0 1
        %403 = vperm.xlu0 %402, %v282
        %v404 = vpop.permute.xlu0 %403
        %406 = vset.pattern.permute.xlu0 1
        %407 = vperm.xlu0 %406, %v283
        %v408 = vpop.permute.xlu0 %407
        %410 = vset.pattern.permute.xlu0 1
        %411 = vperm.xlu0 %410, %v284
        %v412 = vpop.permute.xlu0 %411
        %414 = vset.pattern.permute.xlu0 1
        %415 = vperm.xlu0 %414, %v285
        %v416 = vpop.permute.xlu0 %415
        %418 = vset.pattern.permute.xlu0 1
        %419 = vperm.xlu0 %418, %v286
        %v420 = vpop.permute.xlu0 %419
        %422 = vset.pattern.permute.xlu0 1
        %423 = vperm.xlu0 %422, %v287
        %v424 = vpop.permute.xlu0 %423
        %426 = vset.pattern.permute.xlu0 1
        %427 = vperm.xlu0 %426, %v288
        %v428 = vpop.permute.xlu0 %427
        %430 = vset.pattern.permute.xlu0 1
        %431 = vperm.xlu0 %430, %v289
        %v432 = vpop.permute.xlu0 %431
        %434 = vset.pattern.permute.xlu0 1
        %435 = vperm.xlu0 %434, %v290
        %v436 = vpop.permute.xlu0 %435
        %438 = vset.pattern.permute.xlu0 1
        %439 = vperm.xlu0 %438, %v291
        %v440 = vpop.permute.xlu0 %439
        %442 = vset.pattern.permute.xlu0 1
        %443 = vperm.xlu0 %442, %v292
        %v444 = vpop.permute.xlu0 %443
        %446 = vset.pattern.permute.xlu0 1
        %447 = vperm.xlu0 %446, %v293
        %v448 = vpop.permute.xlu0 %447
        %450 = vset.pattern.permute.xlu0 1
        %451 = vperm.xlu0 %450, %v294
        %v452 = vpop.permute.xlu0 %451
        %454 = vset.pattern.permute.xlu0 1
        %455 = vperm.xlu0 %454, %v295
        %v456 = vpop.permute.xlu0 %455
        %458 = vset.pattern.permute.xlu0 1
        %459 = vperm.xlu0 %458, %v296
        %v460 = vpop.permute.xlu0 %459
        %v462 = vlaneseq
        %v463 = vshrl.u32 %v462, 7
        %v464 = vsub.s32 1, %v463
        %v465 = vrot.slane %v297, %v464
        %v466 = vmul.f32 %v400, %v465
        %v467 = vmul.f32 %v404, %v465
        %v468 = vmul.f32 %v408, %v465
        %v469 = vmul.f32 %v412, %v465
        %v470 = vmul.f32 %v416, %v465
        %v471 = vmul.f32 %v420, %v465
        %v472 = vmul.f32 %v424, %v465
        %v473 = vmul.f32 %v428, %v465
        %v474 = vmul.f32 %v432, %v465
        %v475 = vmul.f32 %v436, %v465
        %v476 = vmul.f32 %v440, %v465
        %v477 = vmul.f32 %v444, %v465
        %v478 = vmul.f32 %v448, %v465
        %v479 = vmul.f32 %v452, %v465
        %v480 = vmul.f32 %v456, %v465
        %v481 = vmul.f32 %v460, %v465
        %v482 = vadd.f32 %v382, %v466
        %v483 = vadd.f32 %v383, %v467
        %v484 = vadd.f32 %v384, %v468
        %v485 = vadd.f32 %v385, %v469
        %v486 = vadd.f32 %v386, %v470
        %v487 = vadd.f32 %v387, %v471
        %v488 = vadd.f32 %v388, %v472
        %v489 = vadd.f32 %v389, %v473
        %v490 = vadd.f32 %v390, %v474
        %v491 = vadd.f32 %v391, %v475
        %v492 = vadd.f32 %v392, %v476
        %v493 = vadd.f32 %v393, %v477
        %v494 = vadd.f32 %v394, %v478
        %v495 = vadd.f32 %v395, %v479
        %v496 = vadd.f32 %v396, %v480
        %v497 = vadd.f32 %v397, %v481
        %v498 = vld [vmem:[%s2] sm:$0x1]
        %v500 = vlaneseq
        %v501 = vshrl.u32 %v500, 7
        %v502 = vsub.s32 0, %v501
        %v503 = vrot.slane %v498, %v502
        %v505 = vadd.f32 %v482, %v503
        %v506 = vadd.f32 %v483, %v503
        %v507 = vadd.f32 %v484, %v503
        %v508 = vadd.f32 %v485, %v503
        %v509 = vadd.f32 %v486, %v503
        %v510 = vadd.f32 %v487, %v503
        %v511 = vadd.f32 %v488, %v503
        %v512 = vadd.f32 %v489, %v503
        %v513 = vadd.f32 %v490, %v503
        %v514 = vadd.f32 %v491, %v503
        %v515 = vadd.f32 %v492, %v503
        %v516 = vadd.f32 %v493, %v503
        %v517 = vadd.f32 %v494, %v503
        %v518 = vadd.f32 %v495, %v503
        %v519 = vadd.f32 %v496, %v503
        %v520 = vadd.f32 %v497, %v503
        %v521 = vmax.f32 %v505, 0.0
        %v522 = vmax.f32 %v506, 0.0
        %v523 = vmax.f32 %v507, 0.0
        %v524 = vmax.f32 %v508, 0.0
        %v525 = vmax.f32 %v509, 0.0
        %v526 = vmax.f32 %v510, 0.0
        %v527 = vmax.f32 %v511, 0.0
        %v528 = vmax.f32 %v512, 0.0
        %v529 = vmax.f32 %v513, 0.0
        %v530 = vmax.f32 %v514, 0.0
        %v531 = vmax.f32 %v515, 0.0
        %v532 = vmax.f32 %v516, 0.0
        %v533 = vmax.f32 %v517, 0.0
        %v534 = vmax.f32 %v518, 0.0
        %v535 = vmax.f32 %v519, 0.0
        %v536 = vmax.f32 %v520, 0.0
        %v537 = vpack.c.bf16 %v522, %v521
        %v538 = vpack.c.bf16 %v524, %v523
        %v539 = vpack.c.bf16 %v526, %v525
        %v540 = vpack.c.bf16 %v528, %v527
        %v541 = vpack.c.bf16 %v530, %v529
        %v542 = vpack.c.bf16 %v532, %v531
        %v543 = vpack.c.bf16 %v534, %v533
        %v544 = vpack.c.bf16 %v536, %v535
        %v545 = vld [vmem:[%s3] sm:$0xf]
        %v546 = vld [vmem:[%s3 + $0x4] sm:$0xf]
        %v547 = vld [vmem:[%s3 + $0x8] sm:$0xf]
        %v548 = vld [vmem:[%s3 + $0xc] sm:$0xf]
        %v549 = vld [vmem:[%s3 + $0x10] sm:$0xf]
        %v550 = vld [vmem:[%s3 + $0x14] sm:$0xf]
        %v551 = vld [vmem:[%s3 + $0x18] sm:$0xf]
        %v552 = vld [vmem:[%s3 + $0x1c] sm:$0xf]
        %v553 = vld [vmem:[%s4] sm:$0x1]
        %v555 = vlaneseq
        %v556 = vshrl.u32 %v555, 7
        %v557 = vsub.s32 0, %v556
        %v558 = vrot.slane %v553, %v557
        %v568 = vunpack.c.l.b16 %v545
        %v569 = vunpack.c.l.b16 %v546
        %v570 = vunpack.c.l.b16 %v547
        %v571 = vunpack.c.l.b16 %v548
        %v572 = vunpack.c.l.b16 %v549
        %v573 = vunpack.c.l.b16 %v550
        %v574 = vunpack.c.l.b16 %v551
        %v575 = vunpack.c.l.b16 %v552
        %v576 = vpack.c.b16 %v569, %v568
        %v577 = vpack.c.b16 %v571, %v570
        %v578 = vpack.c.b16 %v573, %v572
        %v579 = vpack.c.b16 %v575, %v574
        %vm584 = vcmask 523264
        %v586 = vsel %vm584, %v537, 0
        %v589 = vsel %vm584, %v538, 0
        %v592 = vsel %vm584, %v539, 0
        %v595 = vsel %vm584, %v540, 0
        %v598 = vsel %vm584, %v541, 0
        %v601 = vsel %vm584, %v542, 0
        %v604 = vsel %vm584, %v543, 0
        %v607 = vsel %vm584, %v544, 0
        %609 = vmatprep.subr.bf16.mxu0 0
        %610 = vmatpush1.bf16.msra.mxu0 %v576
        %611 = vmatprep.subr.bf16.mxu0 0
        %612 = vmatpush1.bf16.msra.mxu0 %v577
        %613 = vmatprep.subr.bf16.mxu0 0
        %614 = vmatpush1.bf16.msra.mxu0 %v578
        %615 = vmatprep.subr.bf16.mxu0 0
        %616 = vmatpush1.bf16.msra.mxu0 %v579
        %617 = vmatprep.subr.bf16.mxu0 0
        %618 = vmatpush1.bf16.msra.mxu0 0
        %619 = vmatprep.subr.bf16.mxu0 0
        %620 = vmatpush1.bf16.msra.mxu0 0
        %621 = vmatprep.subr.bf16.mxu0 0
        %622 = vmatpush1.bf16.msra.mxu0 0
        %623 = vmatprep.subr.bf16.mxu0 0
        %624 = vmatpush1.bf16.msra.mxu0 0
        %625 = vmatprep.subr.bf16.mxu0 0
        %626 = vmatpush1.bf16.msra.mxu0 0
        %627 = vmatprep.subr.bf16.mxu0 0
        %628 = vmatpush1.bf16.msra.mxu0 0
        %629 = vmatprep.subr.bf16.mxu0 0
        %630 = vmatpush1.bf16.msra.mxu0 0
        %631 = vmatprep.subr.bf16.mxu0 0
        %632 = vmatpush1.bf16.msra.mxu0 0
        %633 = vmatprep.subr.bf16.mxu0 0
        %634 = vmatpush1.bf16.msra.mxu0 0
        %635 = vmatprep.subr.bf16.mxu0 0
        %636 = vmatpush1.bf16.msra.mxu0 0
        %637 = vmatprep.subr.bf16.mxu0 0
        %638 = vmatpush1.bf16.msra.mxu0 0
        %639 = vmatprep.subr.bf16.mxu0 0
        %640 = vmatpush1.bf16.msra.mxu0 0
        %641 = vmatprep.mubr.bf16.mxu0 0
        %642 = vmatmul.mubr.bf16.gmra.mrb[0].mxu0 %v586
        %v643 = vpop.f32.mrb[0].mxu0
        %v644 = vadd.f32 %v558, %v643
        %v645 = vpop.f32.mrb[0].mxu0
        %v646 = vpop.f32.mrb[0].mxu0
        %v647 = vadd.f32 %v558, %v646
        %v648 = vpop.f32.mrb[0].mxu0
        %649 = vmatprep.mubr.bf16.mxu0 0
        %650 = vmatmul.mubr.bf16.gmra.mrb[0].mxu0 %v589
        %v651 = vpop.f32.mrb[0].mxu0
        %v652 = vadd.f32 %v558, %v651
        %v653 = vpop.f32.mrb[0].mxu0
        %v654 = vpop.f32.mrb[0].mxu0
        %v655 = vadd.f32 %v558, %v654
        %v656 = vpop.f32.mrb[0].mxu0
        %657 = vmatprep.mubr.bf16.mxu0 0
        %658 = vmatmul.mubr.bf16.gmra.mrb[0].mxu0 %v592
        %v659 = vpop.f32.mrb[0].mxu0
        %v660 = vadd.f32 %v558, %v659
        %v661 = vpop.f32.mrb[0].mxu0
        %v662 = vpop.f32.mrb[0].mxu0
        %v663 = vadd.f32 %v558, %v662
        %v664 = vpop.f32.mrb[0].mxu0
        %665 = vmatprep.mubr.bf16.mxu0 0
        %666 = vmatmul.mubr.bf16.gmra.mrb[0].mxu0 %v595
        %v667 = vpop.f32.mrb[0].mxu0
        %v668 = vadd.f32 %v558, %v667
        %v669 = vpop.f32.mrb[0].mxu0
        %v670 = vpop.f32.mrb[0].mxu0
        %v671 = vadd.f32 %v558, %v670
        %v672 = vpop.f32.mrb[0].mxu0
        %673 = vmatprep.mubr.bf16.mxu0 0
        %674 = vmatmul.mubr.bf16.gmra.mrb[0].mxu0 %v598
        %v675 = vpop.f32.mrb[0].mxu0
        %v676 = vadd.f32 %v558, %v675
        %v677 = vpop.f32.mrb[0].mxu0
        %v678 = vpop.f32.mrb[0].mxu0
        %v679 = vadd.f32 %v558, %v678
        %v680 = vpop.f32.mrb[0].mxu0
        %681 = vmatprep.mubr.bf16.mxu0 0
        %682 = vmatmul.mubr.bf16.gmra.mrb[0].mxu0 %v601
        %v683 = vpop.f32.mrb[0].mxu0
        %v684 = vadd.f32 %v558, %v683
        %v685 = vpop.f32.mrb[0].mxu0
        %v686 = vpop.f32.mrb[0].mxu0
        %v687 = vadd.f32 %v558, %v686
        %v688 = vpop.f32.mrb[0].mxu0
        %689 = vmatprep.mubr.bf16.mxu0 0
        %690 = vmatmul.mubr.bf16.gmra.mrb[0].mxu0 %v604
        %v691 = vpop.f32.mrb[0].mxu0
        %v692 = vadd.f32 %v558, %v691
        %v693 = vpop.f32.mrb[0].mxu0
        %v694 = vpop.f32.mrb[0].mxu0
        %v695 = vadd.f32 %v558, %v694
        %v696 = vpop.f32.mrb[0].mxu0
        %697 = vmatprep.mubr.bf16.mxu0 0
        %698 = vmatmul.mubr.bf16.gmra.mrb[0].mxu0 %v607
        %v699 = vpop.f32.mrb[0].mxu0
        %v700 = vadd.f32 %v558, %v699
        %v701 = vpop.f32.mrb[0].mxu0
        %v702 = vpop.f32.mrb[0].mxu0
        %v703 = vadd.f32 %v558, %v702
        %v704 = vpop.f32.mrb[0].mxu0
        %705 = vdwg.mxu0
        %v706 = vmax.f32 %v644, 0.0
        %v707 = vmax.f32 %v647, 0.0
        %v708 = vmax.f32 %v652, 0.0
        %v709 = vmax.f32 %v655, 0.0
        %v710 = vmax.f32 %v660, 0.0
        %v711 = vmax.f32 %v663, 0.0
        %v712 = vmax.f32 %v668, 0.0
        %v713 = vmax.f32 %v671, 0.0
        %v714 = vmax.f32 %v676, 0.0
        %v715 = vmax.f32 %v679, 0.0
        %v716 = vmax.f32 %v684, 0.0
        %v717 = vmax.f32 %v687, 0.0
        %v718 = vmax.f32 %v692, 0.0
        %v719 = vmax.f32 %v695, 0.0
        %v720 = vmax.f32 %v700, 0.0
        %v721 = vmax.f32 %v703, 0.0
        %v722 = vpack.c.bf16 %v707, %v706
        %v723 = vpack.c.bf16 %v709, %v708
        %v724 = vpack.c.bf16 %v711, %v710
        %v725 = vpack.c.bf16 %v713, %v712
        %v726 = vpack.c.bf16 %v715, %v714
        %v727 = vpack.c.bf16 %v717, %v716
        %v728 = vpack.c.bf16 %v719, %v718
        %v729 = vpack.c.bf16 %v721, %v720
        %v730 = vld [vmem:[%s5] sm:$0xf]
        %v731 = vld [vmem:[%s5 + $0x4] sm:$0xf]
        %v732 = vld [vmem:[%s5 + $0x8] sm:$0xf]
        %v733 = vld [vmem:[%s5 + $0xc] sm:$0xf]
        %v734 = vld [vmem:[%s6] sm:$0x1]
        %v736 = vlaneseq
        %v737 = vshrl.u32 %v736, 7
        %v738 = vsub.s32 0, %v737
        %v739 = vrot.slane %v734, %v738
        %v745 = vunpack.c.l.b16 %v730
        %v746 = vunpack.c.l.b16 %v731
        %v747 = vunpack.c.l.b16 %v732
        %v748 = vunpack.c.l.b16 %v733
        %v749 = vpack.c.b16 %v746, %v745
        %v750 = vpack.c.b16 %v748, %v747
        %vm753 = vcmask 261120
        %v755 = vsel %vm753, %v722, 0
        %v758 = vsel %vm753, %v723, 0
        %v761 = vsel %vm753, %v724, 0
        %v764 = vsel %vm753, %v725, 0
        %v767 = vsel %vm753, %v726, 0
        %v770 = vsel %vm753, %v727, 0
        %v773 = vsel %vm753, %v728, 0
        %v776 = vsel %vm753, %v729, 0
        %778 = vmatprep.subr.bf16.mxu0 0
        %779 = vmatpush1.bf16.msra.mxu0 %v749
        %780 = vmatprep.subr.bf16.mxu0 0
        %781 = vmatpush1.bf16.msra.mxu0 %v750
        %782 = vmatprep.subr.bf16.mxu0 0
        %783 = vmatpush1.bf16.msra.mxu0 0
        %784 = vmatprep.subr.bf16.mxu0 0
        %785 = vmatpush1.bf16.msra.mxu0 0
        %786 = vmatprep.subr.bf16.mxu0 0
        %787 = vmatpush1.bf16.msra.mxu0 0
        %788 = vmatprep.subr.bf16.mxu0 0
        %789 = vmatpush1.bf16.msra.mxu0 0
        %790 = vmatprep.subr.bf16.mxu0 0
        %791 = vmatpush1.bf16.msra.mxu0 0
        %792 = vmatprep.subr.bf16.mxu0 0
        %793 = vmatpush1.bf16.msra.mxu0 0
        %794 = vmatprep.subr.bf16.mxu0 0
        %795 = vmatpush1.bf16.msra.mxu0 0
        %796 = vmatprep.subr.bf16.mxu0 0
        %797 = vmatpush1.bf16.msra.mxu0 0
        %798 = vmatprep.subr.bf16.mxu0 0
        %799 = vmatpush1.bf16.msra.mxu0 0
        %800 = vmatprep.subr.bf16.mxu0 0
        %801 = vmatpush1.bf16.msra.mxu0 0
        %802 = vmatprep.subr.bf16.mxu0 0
        %803 = vmatpush1.bf16.msra.mxu0 0
        %804 = vmatprep.subr.bf16.mxu0 0
        %805 = vmatpush1.bf16.msra.mxu0 0
        %806 = vmatprep.subr.bf16.mxu0 0
        %807 = vmatpush1.bf16.msra.mxu0 0
        %808 = vmatprep.subr.bf16.mxu0 0
        %809 = vmatpush1.bf16.msra.mxu0 0
        %810 = vmatprep.mubr.bf16.mxu0 0
        %811 = vmatmul.mubr.bf16.gmra.mrb[0].mxu0 %v755
        %v812 = vpop.f32.mrb[0].mxu0
        %v813 = vadd.f32 %v739, %v812
        %v814 = vpop.f32.mrb[0].mxu0
        %v815 = vpop.f32.mrb[0].mxu0
        %v816 = vadd.f32 %v739, %v815
        %v817 = vpop.f32.mrb[0].mxu0
        %818 = vmatprep.mubr.bf16.mxu0 0
        %819 = vmatmul.mubr.bf16.gmra.mrb[0].mxu0 %v758
        %v820 = vpop.f32.mrb[0].mxu0
        %v821 = vadd.f32 %v739, %v820
        %v822 = vpop.f32.mrb[0].mxu0
        %v823 = vpop.f32.mrb[0].mxu0
        %v824 = vadd.f32 %v739, %v823
        %v825 = vpop.f32.mrb[0].mxu0
        %826 = vmatprep.mubr.bf16.mxu0 0
        %827 = vmatmul.mubr.bf16.gmra.mrb[0].mxu0 %v761
        %v828 = vpop.f32.mrb[0].mxu0
        %v829 = vadd.f32 %v739, %v828
        %v830 = vpop.f32.mrb[0].mxu0
        %v831 = vpop.f32.mrb[0].mxu0
        %v832 = vadd.f32 %v739, %v831
        %v833 = vpop.f32.mrb[0].mxu0
        %834 = vmatprep.mubr.bf16.mxu0 0
        %835 = vmatmul.mubr.bf16.gmra.mrb[0].mxu0 %v764
        %v836 = vpop.f32.mrb[0].mxu0
        %v837 = vadd.f32 %v739, %v836
        %v838 = vpop.f32.mrb[0].mxu0
        %v839 = vpop.f32.mrb[0].mxu0
        %v840 = vadd.f32 %v739, %v839
        %v841 = vpop.f32.mrb[0].mxu0
        %842 = vmatprep.mubr.bf16.mxu0 0
        %843 = vmatmul.mubr.bf16.gmra.mrb[0].mxu0 %v767
        %v844 = vpop.f32.mrb[0].mxu0
        %v845 = vadd.f32 %v739, %v844
        %v846 = vpop.f32.mrb[0].mxu0
        %v847 = vpop.f32.mrb[0].mxu0
        %v848 = vadd.f32 %v739, %v847
        %v849 = vpop.f32.mrb[0].mxu0
        %850 = vmatprep.mubr.bf16.mxu0 0
        %851 = vmatmul.mubr.bf16.gmra.mrb[0].mxu0 %v770
        %v852 = vpop.f32.mrb[0].mxu0
        %v853 = vadd.f32 %v739, %v852
        %v854 = vpop.f32.mrb[0].mxu0
        %v855 = vpop.f32.mrb[0].mxu0
        %v856 = vadd.f32 %v739, %v855
        %v857 = vpop.f32.mrb[0].mxu0
        %858 = vmatprep.mubr.bf16.mxu0 0
        %859 = vmatmul.mubr.bf16.gmra.mrb[0].mxu0 %v773
        %v860 = vpop.f32.mrb[0].mxu0
        %v861 = vadd.f32 %v739, %v860
        %v862 = vpop.f32.mrb[0].mxu0
        %v863 = vpop.f32.mrb[0].mxu0
        %v864 = vadd.f32 %v739, %v863
        %v865 = vpop.f32.mrb[0].mxu0
        %866 = vmatprep.mubr.bf16.mxu0 0
        %867 = vmatmul.mubr.bf16.gmra.mrb[0].mxu0 %v776
        %v868 = vpop.f32.mrb[0].mxu0
        %v869 = vadd.f32 %v739, %v868
        %v870 = vpop.f32.mrb[0].mxu0
        %v871 = vpop.f32.mrb[0].mxu0
        %v872 = vadd.f32 %v739, %v871
        %v873 = vpop.f32.mrb[0].mxu0
        %874 = vdwg.mxu0
        %875 = vst [vmem:[%s272] sm:$0xff] %v813
        %876 = vst [vmem:[%s272 + $0x8] sm:$0xff] %v816
        %877 = vst [vmem:[%s272 + $0x10] sm:$0xff] %v821
        %878 = vst [vmem:[%s272 + $0x18] sm:$0xff] %v824
        %879 = vst [vmem:[%s272 + $0x20] sm:$0xff] %v829
        %880 = vst [vmem:[%s272 + $0x28] sm:$0xff] %v832
        %881 = vst [vmem:[%s272 + $0x30] sm:$0xff] %v837
        %882 = vst [vmem:[%s272 + $0x38] sm:$0xff] %v840
        %883 = vst [vmem:[%s272 + $0x40] sm:$0xff] %v845
        %884 = vst [vmem:[%s272 + $0x48] sm:$0xff] %v848
        %885 = vst [vmem:[%s272 + $0x50] sm:$0xff] %v853
        %886 = vst [vmem:[%s272 + $0x58] sm:$0xff] %v856
        %887 = vst [vmem:[%s272 + $0x60] sm:$0xff] %v861
        %888 = vst [vmem:[%s272 + $0x68] sm:$0xff] %v864
        %889 = vst [vmem:[%s272 + $0x70] sm:$0xff] %v869
        %890 = vst [vmem:[%s272 + $0x78] sm:$0xff] %v872
        %s891 = sand.u32 %s181, 1
        %s892 = scalar_lea.sflag [#allocation3], %s891
        %s893 = sand.u32 %s181, 1
        %s894 = smul.addr %s893, 128
        %s895 = scalar_lea.vmem [#allocation2], %s894
        // Predicated region
        $region49: #{tpu_custom_call.1} parent=47 // pred_check
          %p896 = pneg %p191
        $region50: #{tpu_custom_call.1} parent=47 // pred_check_branch
          %898 = sbr.rel (%p896) target = $region52
        $region51: #{tpu_custom_call.1} parent=47 // pred_region
          %s899 = smul.u32 16, %s21
          %s901 = ssub.s32 2048, 2048
          %902 = vsyncadd %s892, %s901
          %s903 = smul.addr %s899, 128
          %s904 = scalar_lea.hbm %s7, %s903
          %s905 = sshll.u32 %s895, 4
          %s906 = int_to_ptr.vmem [resolvable:$true] %s905
          %911 = dma.vmem_to_hbm [thread:$0]  %s906, 2048, %s904, %s892, 128, 128, 8
        $region52: #{tpu_custom_call.1} parent=47 // pred_fallthru
          _
      $region48: #{tpu_custom_call.1} parent=5 // pred_fallthru
        _
      %p912 = scmp.le.s32.totalorder 2, %s16
      // Predicated region
      $region53: #{tpu_custom_call.1} parent=5 // pred_check
        %p913 = pneg %p912
      $region54: #{tpu_custom_call.1} parent=5 // pred_check_branch
        %915 = sbr.rel (%p913) target = $region56
      $region55: #{tpu_custom_call.1} parent=5 // pred_region
        %s916 = ssub.s32 %s16, 2
        // Predicated region
        $region57: #{tpu_custom_call.1} parent=55 // pred_check
          %p917 = pneg %p197
        $region58: #{tpu_custom_call.1} parent=55 // pred_check_branch
          %919 = sbr.rel (%p917) target = $region60
        $region59: #{tpu_custom_call.1} parent=55 // pred_region
          %s920 = sand.u32 %s182, 1
          %s921 = scalar_lea.sflag [#allocation3], %s920
          %s922 = sand.u32 %s182, 1
          %s923 = smul.addr %s922, 128
          %s924 = scalar_lea.vmem [#allocation2], %s923
          %925 = dma.done %s921, 2048
        $region60: #{tpu_custom_call.1} parent=55 // pred_fallthru
          _
      $region56: #{tpu_custom_call.1} parent=5 // pred_fallthru
        _
    $region6: #{tpu_custom_call.1} parent=1 // loop_footer
      %s20 = sadd.s32 1, %s16
    $region7: #{tpu_custom_call.1} parent=1 // loop_footer_branch
      %15 = sbr.rel target = $region3
    $region8: #{tpu_custom_call.1} parent=1 // loop_exit
      _
    %926 = vsyncpa [#allocation3], 1
    %s927 = scalar_lea.sflag [#allocation3], 1
    %928 = vsyncpa %s927, 1

</llo_original>
